<compile_context>
chip_gen: v5e
topology: v5e:2x2
jax: 0.10.0
libtpu: 0.0.40
codegen_flags: <defaults>
</compile_context>

<pallas_src>
import jax
import jax.numpy as jnp
from jax.experimental import pallas as pl
from jax.experimental.pallas import tpu as pltpu

HIDDEN = 10  # fixed by the module definition (nn.Linear(state_space, 10))


def _round_up(n, m):
    return pl.cdiv(n, m) * m


def _mlp_kernel(x_ref, w1_ref, b1_ref, w2_ref, b2_ref, o_ref):
    # x_ref:  [TB, S]      w1_ref: [S, H_pad]     b1_ref: [1, H_pad]
    # w2_ref: [H_pad, A_pad]  b2_ref: [1, A_pad]  o_ref:  [TB, A_pad]
    x = x_ref[...].astype(jnp.float32)

    h = jnp.dot(x, w1_ref[...], preferred_element_type=jnp.float32) + b1_ref[...]
    h = jnp.tanh(h)

    out = jnp.dot(h, w2_ref[...], preferred_element_type=jnp.float32) + b2_ref[...]
    o_ref[...] = out.astype(o_ref.dtype)  # lane-dense (A_pad = multiple of 128)


def net_forward(x, w1, b1, w2, b2, *, block_b=512):
    """Pallas forward pass: fc2(tanh(fc1(x))).

    x:  [B, S] float32
    w1: [S, H] (already transposed vs. torch's [out, in]); b1: [H] or [1, H]
    w2: [H, A];                                            b2: [A] or [1, A]
    Returns [B, A] float32.
    """
    B, S = x.shape
    H = w1.shape[1]
    A = w2.shape[1]

    # --- pad to lane-dense / MXU-aligned shapes (zeros => math unchanged) ---
    H_pad = _round_up(max(H, 1), 128)
    A_pad = _round_up(max(A, 1), 128)

    w1p = jnp.zeros((S, H_pad), jnp.float32).at[:, :H].set(w1.astype(jnp.float32))
    b1p = jnp.zeros((1, H_pad), jnp.float32).at[:, :H].set(
        jnp.reshape(b1, (1, H)).astype(jnp.float32))
    w2p = jnp.zeros((H_pad, A_pad), jnp.float32).at[:H, :A].set(w2.astype(jnp.float32))
    b2p = jnp.zeros((1, A_pad), jnp.float32).at[:, :A].set(
        jnp.reshape(b2, (1, A)).astype(jnp.float32))

    # --- batch tiling: pad B to a multiple of the batch tile TB ---
    TB = int(min(block_b, _round_up(B, 8)))      # divisible by 8 (sublane rule)
    B_pad = int(_round_up(B, TB))
    xp = x if B_pad == B else jnp.zeros((B_pad, S), x.dtype).at[:B].set(x)

    grid = (B_pad // TB,)

    out = pl.pallas_call(
        _mlp_kernel,
        out_shape=jax.ShapeDtypeStruct((B_pad, A_pad), jnp.float32),
        grid_spec=pltpu.PrefetchScalarGridSpec(
            num_scalar_prefetch=0,
            grid=grid,
            in_specs=[
                # x is streamed / double-buffered over the batch grid.
                pl.BlockSpec((TB, S), lambda i: (i, 0)),
                # Weights & biases: same block every step -> VMEM-resident.
                pl.BlockSpec((S, H_pad), lambda i: (0, 0)),
                pl.BlockSpec((1, H_pad), lambda i: (0, 0)),
                pl.BlockSpec((H_pad, A_pad), lambda i: (0, 0)),
                pl.BlockSpec((1, A_pad), lambda i: (0, 0)),
            ],
            out_specs=pl.BlockSpec((TB, A_pad), lambda i: (i, 0)),
        ),
        compiler_params=pltpu.CompilerParams(
            # Batch tiles are independent -> shard across the 2 TCs on v7x.
            dimension_semantics=("parallel",),
        ),
    )(xp, w1p, b1p, w2p, b2p)

    return out[:B, :A]


@jax.jit
def net_forward_small(x, w1, b1, w2, b2):
    """Non-Pallas fast path for tiny per-env-step batches (lets XLA fuse freely;
    at B~8/S~4 the pallas_call dispatch itself is pure overhead)."""
    return jnp.tanh(x @ w1 + jnp.reshape(b1, (1, -1))) @ w2 + jnp.reshape(b2, (1, -1))


def init_params(key, state_space, hidden, action_space):
    """Deterministic init mimicking nn.Linear's U(-1/sqrt(fan_in), 1/sqrt(fan_in))."""
    k1, k2, k3, k4 = jax.random.split(key, 4)
    bound1 = 1.0 / jnp.sqrt(jnp.float32(state_space))
    bound2 = 1.0 / jnp.sqrt(jnp.float32(hidden))
    # Stored as [in, out] (transpose of torch's [out, in]) for direct x @ W.
    w1 = jax.random.uniform(k1, (state_space, hidden), jnp.float32, -bound1, bound1)
    b1 = jax.random.uniform(k2, (1, hidden), jnp.float32, -bound1, bound1)
    w2 = jax.random.uniform(k3, (hidden, action_space), jnp.float32, -bound2, bound2)
    b2 = jax.random.uniform(k4, (1, action_space), jnp.float32, -bound2, bound2)
    return w1, b1, w2, b2


if __name__ == "__main__":
    state_space = 4     # e.g. CartPole observation dim
    action_space = 2    # e.g. CartPole action dim
    batch = 64          # small, but enough to exercise batch-grid tiling

    key = jax.random.PRNGKey(0)
    k_x, k_p = jax.random.split(key)

    x = jax.random.normal(k_x, (batch, state_space), dtype=jnp.float32)
    w1, b1, w2, b2 = init_params(k_p, state_space, HIDDEN, action_space)

    # Small batch tile (32) so the grid has 2 steps and tiling is exercised.
    out = net_forward(x, w1, b1, w2, b2, block_b=32)
    jax.block_until_ready(out)

    # Reference check in plain JAX (same math).
    ref = jnp.tanh(x @ w1 + b1) @ w2 + b2
    assert out.shape == (batch, action_space)
    assert jnp.allclose(out, ref, atol=1e-5, rtol=1e-5)

    print("KERNEL_OK")
</pallas_src>

<mosaic_0001>
module attributes {stable_mosaic.version = 11 : i64} {
  func.func @_mlp_kernel(%arg0: i32, %arg1: memref<32x4xf32, #tpu.memory_space<vmem>>, %arg2: memref<4x128xf32, #tpu.memory_space<vmem>>, %arg3: memref<1x128xf32, #tpu.memory_space<vmem>>, %arg4: memref<128x128xf32, #tpu.memory_space<vmem>>, %arg5: memref<1x128xf32, #tpu.memory_space<vmem>>, %arg6: memref<32x128xf32, #tpu.memory_space<vmem>>) attributes {dimension_semantics = [#tpu.dimension_semantics<parallel>], iteration_bounds = array<i64: 2>, scalar_prefetch = 0 : i64, scratch_operands = 0 : i64, tpu.core_type = #tpu.core_type<tc>, window_params = [{transform_indices = @transform_0, window_bounds = array<i64: 32, 4>}, {pipeline_mode = #tpu.pipeline_mode<synchronous>, transform_indices = @transform_1, window_bounds = array<i64: 4, 128>}, {pipeline_mode = #tpu.pipeline_mode<synchronous>, transform_indices = @transform_2, window_bounds = array<i64: 1, 128>}, {pipeline_mode = #tpu.pipeline_mode<synchronous>, transform_indices = @transform_3, window_bounds = array<i64: 128, 128>}, {pipeline_mode = #tpu.pipeline_mode<synchronous>, transform_indices = @transform_4, window_bounds = array<i64: 1, 128>}, {transform_indices = @transform_5, window_bounds = array<i64: 32, 128>}]} {
    %c0 = arith.constant 0 : index
    %c0_0 = arith.constant 0 : index
    %0 = vector.load %arg1[%c0, %c0_0] : memref<32x4xf32, #tpu.memory_space<vmem>>, vector<32x4xf32>
    %c0_1 = arith.constant 0 : index
    %c0_2 = arith.constant 0 : index
    %1 = vector.load %arg2[%c0_1, %c0_2] : memref<4x128xf32, #tpu.memory_space<vmem>>, vector<4x128xf32>
    %cst = arith.constant dense<0.000000e+00> : vector<32x128xf32>
    %2 = tpu.matmul %0, %1, %cst {dimension_numbers = #tpu.dot_dimension_numbers<[1], [0], [0], [1], [0, 0, 1, 1], [], []>} : vector<32x4xf32>, vector<4x128xf32>, vector<32x128xf32> -> vector<32x128xf32>
    %c0_3 = arith.constant 0 : index
    %c0_4 = arith.constant 0 : index
    %3 = vector.load %arg3[%c0_3, %c0_4] : memref<1x128xf32, #tpu.memory_space<vmem>>, vector<1x128xf32>
    %4 = vector.broadcast %3 : vector<1x128xf32> to vector<32x128xf32>
    %5 = arith.addf %2, %4 : vector<32x128xf32>
    %6 = math.tanh %5 : vector<32x128xf32>
    %c0_5 = arith.constant 0 : index
    %c0_6 = arith.constant 0 : index
    %7 = vector.load %arg4[%c0_5, %c0_6] : memref<128x128xf32, #tpu.memory_space<vmem>>, vector<128x128xf32>
    %cst_7 = arith.constant dense<0.000000e+00> : vector<32x128xf32>
    %8 = tpu.matmul %6, %7, %cst_7 {dimension_numbers = #tpu.dot_dimension_numbers<[1], [0], [0], [1], [0, 0, 1, 1], [], []>} : vector<32x128xf32>, vector<128x128xf32>, vector<32x128xf32> -> vector<32x128xf32>
    %c0_8 = arith.constant 0 : index
    %c0_9 = arith.constant 0 : index
    %9 = vector.load %arg5[%c0_8, %c0_9] : memref<1x128xf32, #tpu.memory_space<vmem>>, vector<1x128xf32>
    %10 = vector.broadcast %9 : vector<1x128xf32> to vector<32x128xf32>
    %11 = arith.addf %8, %10 : vector<32x128xf32>
    %c0_10 = arith.constant 0 : index
    %c0_11 = arith.constant 0 : index
    %12 = vector.load %arg6[%c0_10, %c0_11] : memref<32x128xf32, #tpu.memory_space<vmem>>, vector<32x128xf32>
    tpu.vector_store %arg6[%c0_10, %c0_11], %11 {strides = array<i32>} : memref<32x128xf32, #tpu.memory_space<vmem>>, vector<32x128xf32>,
    return
  }
  func.func @transform_0(%arg0: i32) -> (i32, i32) {
    %c0_i32 = arith.constant 0 : i32
    %c0_i32_0 = arith.constant 0 : i32
    return %arg0, %c0_i32 : i32, i32
  }
  func.func @transform_1(%arg0: i32) -> (i32, i32) {
    %c0_i32 = arith.constant 0 : i32
    %c0_i32_0 = arith.constant 0 : i32
    %c0_i32_1 = arith.constant 0 : i32
    return %c0_i32, %c0_i32_0 : i32, i32
  }
  func.func @transform_2(%arg0: i32) -> (i32, i32) {
    %c0_i32 = arith.constant 0 : i32
    %c0_i32_0 = arith.constant 0 : i32
    %c0_i32_1 = arith.constant 0 : i32
    return %c0_i32, %c0_i32_0 : i32, i32
  }
  func.func @transform_3(%arg0: i32) -> (i32, i32) {
    %c0_i32 = arith.constant 0 : i32
    %c0_i32_0 = arith.constant 0 : i32
    %c0_i32_1 = arith.constant 0 : i32
    return %c0_i32, %c0_i32_0 : i32, i32
  }
  func.func @transform_4(%arg0: i32) -> (i32, i32) {
    %c0_i32 = arith.constant 0 : i32
    %c0_i32_0 = arith.constant 0 : i32
    %c0_i32_1 = arith.constant 0 : i32
    return %c0_i32, %c0_i32_0 : i32, i32
  }
  func.func @transform_5(%arg0: i32) -> (i32, i32) {
    %c0_i32 = arith.constant 0 : i32
    %c0_i32_0 = arith.constant 0 : i32
    return %arg0, %c0_i32 : i32, i32
  }
}

</mosaic_0001>

<llo_original>
// kernel: tpu_custom_call.1
$region0: #{tpu_custom_call.1}
  #allocation0 [shape = 'u32[]', space=smem, size = 0x4, offset = 0x4, fixed_abs, tag = 'smem constant byte address 0x4 - core index']
  #allocation1 [shape = 'u32[72,128]{1,0:T(1,128)}', space=vmem, size = 0x9000, scoped, tag = 'internal scratch']
  %s0 = inlined_call_operand.vmem [shape: f32[64,4], index: 0, kind: input, shape index: {}]
  %s1 = inlined_call_operand.vmem [shape: f32[4,128], index: 1, kind: input, shape index: {}]
  %s2 = inlined_call_operand.vmem [shape: f32[1,128], index: 2, kind: input, shape index: {}]
  %s3 = inlined_call_operand.hbm [shape: f32[128,128], index: 3, kind: input, shape index: {}]
  %s4 = inlined_call_operand.vmem [shape: f32[1,128], index: 4, kind: input, shape index: {}]
  %s5 = inlined_call_operand.hbm [shape: f32[64,128], index: 5, kind: output, shape index: {}]
  %s6 = sld [smem:[#allocation0]]
  $region57: #{tpu_custom_call.1} parent=0
    _
  %s8 = ssub.s32 1, %s6
  %s9 = scalar_select 0, %s8, %s6
  $region1: #{tpu_custom_call.1} parent=0
    #allocation2 [shape = 'u8[65536]{0}', space=vmem, size = 0x10000, scoped, tag = 'input window, operand 3, single buffered']
    #allocation3 [shape = 's32[2]{0}', space=sflag, size = 0x8, scoped, tag = 'scoped memory for tpu_custom_call.1']
    #allocation4 [shape = 's32[2]{0}', space=sflag, size = 0x8, scoped, tag = 'scoped memory for tpu_custom_call.1']
    #allocation5 [shape = 'u8[32768]{0}', space=vmem, size = 0x8000, scoped, tag = 'output window, operand 0']
    %10 = vsyncpa [#allocation3], 0
    %11 = vsyncpa [#allocation4], 0
    %s12 = scalar_lea.sflag [#allocation4], 1
    %13 = vsyncpa %s12, 0
    loop: start=0, step=1, limit=4
    $region2: #{tpu_custom_call.1} parent=1 // loop_pre_header
      _
    $region3: #{tpu_custom_call.1} parent=1 // loop_header
      %s15 = sphi 0, %s19
      %p16 = scmp.ge.s32.totalorder %s15, 4
      %s25 = sphi 0, %s27
      %s28 = sphi 0, %s25
      %s29 = sphi 0, %s28
      %s45 = sphi 0, %s29
      %s49 = sphi 0, %s49
      %s51 = sphi 0, %s49
      %s52 = sphi 0, %s51
      %s66 = sphi 0, %s52
      %s70 = sphi 0, %s70
      %s72 = sphi 0, %s70
      %s73 = sphi 0, %s72
      %s87 = sphi 0, %s73
      %s91 = sphi 0, %s91
      %s93 = sphi 0, %s91
      %s94 = sphi 0, %s93
      %s108 = sphi 0, %s94
      %s112 = sphi 0, %s112
      %s114 = sphi 0, %s112
      %s115 = sphi 0, %s114
      %s129 = sphi 0, %s115
      %s135 = sphi 0, %s137
      %s138 = sphi 0, %s135
      %s139 = sphi 0, %s138
      %s155 = sphi 0, %s139
    $region4: #{tpu_custom_call.1} parent=1 // loop_header_branch
      %18 = sbr.rel (%p16) target = $region8
    $region5: #{tpu_custom_call.1} parent=1 // loop_body
      %s20 = ssub.s32 %s15, 1
      %s21 = ssub.s32 %s15, 2
      %s22 = sadd.s32 %s15, 1
      %s23 = ssub.s32 %s15, %s22
      %p24 = scmp.eq.s32.totalorder %s23, 0
      %s26 = sadd.s32 %s25, 1
      %s27 = scalar_select %p24, %s25, %s26
      %p30 = pneg %p24
      %p31 = scmp.eq.s32.totalorder %s15, 1
      %p32 = por %p30, %p31
      %p33 = scmp.ne.s32.totalorder %s25, %s28
      %p34 = scmp.eq.s32.totalorder %s15, 0
      %p35 = por %p33, %p34
      %p36 = scmp.ne.s32.totalorder %s25, %s28
      %p37 = scmp.eq.s32.totalorder %s20, 1
      %p38 = por %p36, %p37
      %p39 = scmp.ne.s32.totalorder %s28, %s29
      %p40 = scmp.eq.s32.totalorder %s20, 0
      %p41 = por %p39, %p40
      %p42 = scmp.ne.s32.totalorder %s28, %s29
      %p43 = scmp.eq.s32.totalorder %s21, 1
      %p44 = por %p42, %p43
      %p46 = scmp.ne.s32.totalorder %s29, %s45
      %p47 = scmp.eq.s32.totalorder %s21, 0
      %p48 = por %p46, %p47
      %s50 = sadd.s32 %s49, 1
      %p53 = scmp.eq.s32.totalorder %s15, 1
      %p54 = scmp.ne.s32.totalorder %s49, %s51
      %p55 = scmp.eq.s32.totalorder %s15, 0
      %p56 = por %p54, %p55
      %p57 = scmp.ne.s32.totalorder %s49, %s51
      %p58 = scmp.eq.s32.totalorder %s20, 1
      %p59 = por %p57, %p58
      %p60 = scmp.ne.s32.totalorder %s51, %s52
      %p61 = scmp.eq.s32.totalorder %s20, 0
      %p62 = por %p60, %p61
      %p63 = scmp.ne.s32.totalorder %s51, %s52
      %p64 = scmp.eq.s32.totalorder %s21, 1
      %p65 = por %p63, %p64
      %p67 = scmp.ne.s32.totalorder %s52, %s66
      %p68 = scmp.eq.s32.totalorder %s21, 0
      %p69 = por %p67, %p68
      %s71 = sadd.s32 %s70, 1
      %p74 = scmp.eq.s32.totalorder %s15, 1
      %p75 = scmp.ne.s32.totalorder %s70, %s72
      %p76 = scmp.eq.s32.totalorder %s15, 0
      %p77 = por %p75, %p76
      %p78 = scmp.ne.s32.totalorder %s70, %s72
      %p79 = scmp.eq.s32.totalorder %s20, 1
      %p80 = por %p78, %p79
      %p81 = scmp.ne.s32.totalorder %s72, %s73
      %p82 = scmp.eq.s32.totalorder %s20, 0
      %p83 = por %p81, %p82
      %p84 = scmp.ne.s32.totalorder %s72, %s73
      %p85 = scmp.eq.s32.totalorder %s21, 1
      %p86 = por %p84, %p85
      %p88 = scmp.ne.s32.totalorder %s73, %s87
      %p89 = scmp.eq.s32.totalorder %s21, 0
      %p90 = por %p88, %p89
      %s92 = sadd.s32 %s91, 1
      %p95 = scmp.eq.s32.totalorder %s15, 1
      %p96 = scmp.ne.s32.totalorder %s91, %s93
      %p97 = scmp.eq.s32.totalorder %s15, 0
      %p98 = por %p96, %p97
      %p99 = scmp.ne.s32.totalorder %s91, %s93
      %p100 = scmp.eq.s32.totalorder %s20, 1
      %p101 = por %p99, %p100
      %p102 = scmp.ne.s32.totalorder %s93, %s94
      %p103 = scmp.eq.s32.totalorder %s20, 0
      %p104 = por %p102, %p103
      %p105 = scmp.ne.s32.totalorder %s93, %s94
      %p106 = scmp.eq.s32.totalorder %s21, 1
      %p107 = por %p105, %p106
      %p109 = scmp.ne.s32.totalorder %s94, %s108
      %p110 = scmp.eq.s32.totalorder %s21, 0
      %p111 = por %p109, %p110
      %s113 = sadd.s32 %s112, 1
      %p116 = scmp.eq.s32.totalorder %s15, 1
      %p117 = scmp.ne.s32.totalorder %s112, %s114
      %p118 = scmp.eq.s32.totalorder %s15, 0
      %p119 = por %p117, %p118
      %p120 = scmp.ne.s32.totalorder %s112, %s114
      %p121 = scmp.eq.s32.totalorder %s20, 1
      %p122 = por %p120, %p121
      %p123 = scmp.ne.s32.totalorder %s114, %s115
      %p124 = scmp.eq.s32.totalorder %s20, 0
      %p125 = por %p123, %p124
      %p126 = scmp.ne.s32.totalorder %s114, %s115
      %p127 = scmp.eq.s32.totalorder %s21, 1
      %p128 = por %p126, %p127
      %p130 = scmp.ne.s32.totalorder %s115, %s129
      %p131 = scmp.eq.s32.totalorder %s21, 0
      %p132 = por %p130, %p131
      %s133 = ssub.s32 %s15, %s22
      %p134 = scmp.eq.s32.totalorder %s133, 0
      %s136 = sadd.s32 %s135, 1
      %s137 = scalar_select %p134, %s135, %s136
      %p140 = pneg %p134
      %p141 = scmp.eq.s32.totalorder %s15, 1
      %p142 = por %p140, %p141
      %p143 = scmp.ne.s32.totalorder %s135, %s138
      %p144 = scmp.eq.s32.totalorder %s15, 0
      %p145 = por %p143, %p144
      %p146 = scmp.ne.s32.totalorder %s135, %s138
      %p147 = scmp.eq.s32.totalorder %s20, 1
      %p148 = por %p146, %p147
      %p149 = scmp.ne.s32.totalorder %s138, %s139
      %p150 = scmp.eq.s32.totalorder %s20, 0
      %p151 = por %p149, %p150
      %p152 = scmp.ne.s32.totalorder %s138, %s139
      %p153 = scmp.eq.s32.totalorder %s21, 1
      %p154 = por %p152, %p153
      %p156 = scmp.ne.s32.totalorder %s139, %s155
      %p157 = scmp.eq.s32.totalorder %s21, 0
      %p158 = por %p156, %p157
      %p159 = scmp.le.s32.totalorder 1, %s15
      %p160 = scmp.lt.s32.totalorder %s15, 3
      %p161 = pnand %p159, %p160
      %p162 = pneg %p161
      // Predicated region
      $region9: #{tpu_custom_call.1} parent=5 // pred_check
        _
      $region10: #{tpu_custom_call.1} parent=5 // pred_check_branch
        %164 = sbr.rel (%p161) target = $region12
      $region11: #{tpu_custom_call.1} parent=5 // pred_region
        %s165 = ssub.s32 %s15, 1
        // Predicated region
        $region13: #{tpu_custom_call.1} parent=11 // pred_check
          %p166 = pneg %p62
        $region14: #{tpu_custom_call.1} parent=11 // pred_check_branch
          %168 = sbr.rel (%p166) target = $region16
        $region15: #{tpu_custom_call.1} parent=11 // pred_region
          _
        $region16: #{tpu_custom_call.1} parent=11 // pred_fallthru
          _
        // Predicated region
        $region17: #{tpu_custom_call.1} parent=11 // pred_check
          %p169 = pneg %p83
        $region18: #{tpu_custom_call.1} parent=11 // pred_check_branch
          %171 = sbr.rel (%p169) target = $region20
        $region19: #{tpu_custom_call.1} parent=11 // pred_region
          _
        $region20: #{tpu_custom_call.1} parent=11 // pred_fallthru
          _
        // Predicated region
        $region21: #{tpu_custom_call.1} parent=11 // pred_check
          %p172 = pneg %p104
        $region22: #{tpu_custom_call.1} parent=11 // pred_check_branch
          %174 = sbr.rel (%p172) target = $region24
        $region23: #{tpu_custom_call.1} parent=11 // pred_region
          %176 = vsyncadd [#allocation3], 0
          %s177 = sshll.u32 %s3, 4
          %s178 = int_to_ptr.hbm [resolvable:$true] %s177
          %s179 = sshll.u32 [#allocation2], 4
          %s180 = int_to_ptr.vmem [resolvable:$true] %s179
          %185 = dma.hbm_to_vmem [thread:$0]  %s178, 2048, %s180, [#allocation3], 128, 128, 8
        $region24: #{tpu_custom_call.1} parent=11 // pred_fallthru
          _
        // Predicated region
        $region25: #{tpu_custom_call.1} parent=11 // pred_check
          %p186 = pneg %p125
        $region26: #{tpu_custom_call.1} parent=11 // pred_check_branch
          %188 = sbr.rel (%p186) target = $region28
        $region27: #{tpu_custom_call.1} parent=11 // pred_region
          _
        $region28: #{tpu_custom_call.1} parent=11 // pred_fallthru
          _
      $region12: #{tpu_custom_call.1} parent=5 // pred_fallthru
        _
      %p189 = scmp.lt.s32.totalorder %s15, 2
      // Predicated region
      $region29: #{tpu_custom_call.1} parent=5 // pred_check
        %p190 = pneg %p189
      $region30: #{tpu_custom_call.1} parent=5 // pred_check_branch
        %192 = sbr.rel (%p190) target = $region32
      $region31: #{tpu_custom_call.1} parent=5 // pred_region
        // Predicated region
        $region33: #{tpu_custom_call.1} parent=31 // pred_check
          %p193 = pneg %p35
        $region34: #{tpu_custom_call.1} parent=31 // pred_check_branch
          %195 = sbr.rel (%p193) target = $region36
        $region35: #{tpu_custom_call.1} parent=31 // pred_region
          %s196 = smul.u32 4, %s15
          %p197 = scmp.lt.s32.totalorder %s196, 7
          %s198 = scalar_select %p197, %s196, 7
          %s199 = smul.addr %s198, 8
          %s200 = scalar_lea.vmem %s0, %s199
          %s201 = smul.u32 4, %s15
        $region36: #{tpu_custom_call.1} parent=31 // pred_fallthru
          _
      $region32: #{tpu_custom_call.1} parent=5 // pred_fallthru
        _
      %p202 = scmp.le.s32.totalorder 1, %s15
      %p203 = scmp.lt.s32.totalorder %s15, 3
      %p204 = pnand %p202, %p203
      %p205 = pneg %p204
      // Predicated region
      $region37: #{tpu_custom_call.1} parent=5 // pred_check
        _
      $region38: #{tpu_custom_call.1} parent=5 // pred_check_branch
        %207 = sbr.rel (%p204) target = $region40
      $region39: #{tpu_custom_call.1} parent=5 // pred_region
        %s208 = ssub.s32 %s15, 1
        // Predicated region
        $region41: #{tpu_custom_call.1} parent=39 // pred_check
          %p209 = pneg %p104
        $region42: #{tpu_custom_call.1} parent=39 // pred_check_branch
          %211 = sbr.rel (%p209) target = $region44
        $region43: #{tpu_custom_call.1} parent=39 // pred_region
          %213 = dma.done [#allocation3], 2048
        $region44: #{tpu_custom_call.1} parent=39 // pred_fallthru
          _
        %s214 = smul.u32 4, %s20
        %p215 = scmp.lt.s32.totalorder %s214, 7
        %s216 = scalar_select %p215, %s214, 7
        %s217 = smul.addr %s216, 8
        %s218 = scalar_lea.vmem %s0, %s217
        %p219 = pneg %p41
        %p220 = pneg %p38
        %p221 = pneg %p62
        %p222 = pneg %p59
        %p223 = pneg %p83
        %p224 = pneg %p80
        %p225 = pneg %p104
        %p226 = pneg %p101
        %p227 = pneg %p125
        %p228 = pneg %p122
        %p229 = pneg %p151
        %p230 = pneg %p148
        %s231 = sand.u32 %s138, 1
        %s232 = scalar_lea.sflag [#allocation4], %s231
        %s233 = sand.u32 %s138, 1
        %s234 = smul.addr %s233, 32
        %s235 = scalar_lea.vmem [#allocation5], %s234
        %s236 = smul.u32 4, %s20
        %p237 = scmp.lt.s32.totalorder %s236, 7
        %s238 = scalar_select %p237, %s236, 7
        %s239 = smul.addr %s238, 8
        %s240 = scalar_lea.vmem %s0, %s239
        %s241 = smul.u32 4, %s20
        %s242 = smul.u32 4, %s20
        %v243 = vld [vmem:[%s240] sm:$0xff]
        %v244 = vld [vmem:[%s240 + $0x8] sm:$0xff]
        %v245 = vld [vmem:[%s240 + $0x10] sm:$0xff]
        %v246 = vld [vmem:[%s240 + $0x18] sm:$0xff]
        %v247 = vld [vmem:[%s1] sm:$0xf]
        %v248 = vld [vmem:[%s2] sm:$0x1]
        %v250 = vperm.slane %v248, 0
        %vm252 = vcmask 31744
        %v254 = vsel %vm252, %v243, 0
        %v257 = vsel %vm252, %v244, 0
        %v260 = vsel %vm252, %v245, 0
        %v263 = vsel %vm252, %v246, 0
        %vm265 = vcmask 1043456
        %v267 = vsel %vm265, %v247, 0
        %269 = vmatpush.msra.mxu0 0.0
        %270 = vmatpush.msra.mxu0 0.0
        %271 = vmatpush.msra.mxu0 0.0
        %272 = vmatpush.msra.mxu0 0.0
        %273 = vmatpush.msra.mxu0 0.0
        %274 = vmatpush.msra.mxu0 0.0
        %275 = vmatpush.msra.mxu0 0.0
        %276 = vmatpush.msra.mxu0 0.0
        %277 = vmatpush.msra.mxu0 0.0
        %278 = vmatpush.msra.mxu0 0.0
        %279 = vmatpush.msra.mxu0 0.0
        %280 = vmatpush.msra.mxu0 0.0
        %281 = vmatpush.msra.mxu0 0.0
        %282 = vmatpush.msra.mxu0 0.0
        %283 = vmatpush.msra.mxu0 0.0
        %284 = vmatpush.msra.mxu0 %v267
        %285 = vmatmul.f32.gmra.mxu0 %v254
        %v286 = vpop.f32.mrf.mxu0
        %v287 = vadd.f32 %v250, %v286
        %288 = vmatmul.f32.gmra.mxu0 %v257
        %v289 = vpop.f32.mrf.mxu0
        %v290 = vadd.f32 %v250, %v289
        %291 = vmatmul.f32.gmra.mxu0 %v260
        %v292 = vpop.f32.mrf.mxu0
        %v293 = vadd.f32 %v250, %v292
        %294 = vmatmul.f32.gmra.mxu0 %v263
        %v295 = vpop.f32.mrf.mxu0
        %v296 = vadd.f32 %v250, %v295
        %297 = vdwg.mxu0
        %v298 = vtanh.pop %v287
        %v299 = vtanh.pop %v290
        %v300 = vtanh.pop %v293
        %v301 = vtanh.pop %v296
        %v302 = vld [vmem:[#allocation2] sm:$0xff]
        %v303 = vld [vmem:[#allocation2 + $0x8] sm:$0xff]
        %v304 = vld [vmem:[#allocation2 + $0x10] sm:$0xff]
        %v305 = vld [vmem:[#allocation2 + $0x18] sm:$0xff]
        %v306 = vld [vmem:[#allocation2 + $0x20] sm:$0xff]
        %v307 = vld [vmem:[#allocation2 + $0x28] sm:$0xff]
        %v308 = vld [vmem:[#allocation2 + $0x30] sm:$0xff]
        %v309 = vld [vmem:[#allocation2 + $0x38] sm:$0xff]
        %v310 = vld [vmem:[#allocation2 + $0x40] sm:$0xff]
        %v311 = vld [vmem:[#allocation2 + $0x48] sm:$0xff]
        %v312 = vld [vmem:[#allocation2 + $0x50] sm:$0xff]
        %v313 = vld [vmem:[#allocation2 + $0x58] sm:$0xff]
        %v314 = vld [vmem:[#allocation2 + $0x60] sm:$0xff]
        %v315 = vld [vmem:[#allocation2 + $0x68] sm:$0xff]
        %v316 = vld [vmem:[#allocation2 + $0x70] sm:$0xff]
        %v317 = vld [vmem:[#allocation2 + $0x78] sm:$0xff]
        %v318 = vld [vmem:[%s4] sm:$0x1]
        %v320 = vperm.slane %v318, 0
        %322 = vmatpush.msra.mxu0 %v317
        %323 = vmatpush.msra.mxu0 %v316
        %324 = vmatpush.msra.mxu0 %v315
        %325 = vmatpush.msra.mxu0 %v314
        %326 = vmatpush.msra.mxu0 %v313
        %327 = vmatpush.msra.mxu0 %v312
        %328 = vmatpush.msra.mxu0 %v311
        %329 = vmatpush.msra.mxu0 %v310
        %330 = vmatpush.msra.mxu0 %v309
        %331 = vmatpush.msra.mxu0 %v308
        %332 = vmatpush.msra.mxu0 %v307
        %333 = vmatpush.msra.mxu0 %v306
        %334 = vmatpush.msra.mxu0 %v305
        %335 = vmatpush.msra.mxu0 %v304
        %336 = vmatpush.msra.mxu0 %v303
        %337 = vmatpush.msra.mxu0 %v302
        %338 = vmatmul.f32.gmra.mxu0 %v298
        %v339 = vpop.f32.mrf.mxu0
        %v340 = vadd.f32 %v320, %v339
        %341 = vmatmul.f32.gmra.mxu0 %v299
        %v342 = vpop.f32.mrf.mxu0
        %v343 = vadd.f32 %v320, %v342
        %344 = vmatmul.f32.gmra.mxu0 %v300
        %v345 = vpop.f32.mrf.mxu0
        %v346 = vadd.f32 %v320, %v345
        %347 = vmatmul.f32.gmra.mxu0 %v301
        %v348 = vpop.f32.mrf.mxu0
        %v349 = vadd.f32 %v320, %v348
        %350 = vdwg.mxu0
        %351 = vst [vmem:[%s235] sm:$0xff] %v340
        %352 = vst [vmem:[%s235 + $0x8] sm:$0xff] %v343
        %353 = vst [vmem:[%s235 + $0x10] sm:$0xff] %v346
        %354 = vst [vmem:[%s235 + $0x18] sm:$0xff] %v349
        %s355 = sand.u32 %s138, 1
        %s356 = scalar_lea.sflag [#allocation4], %s355
        %s357 = sand.u32 %s138, 1
        %s358 = smul.addr %s357, 32
        %s359 = scalar_lea.vmem [#allocation5], %s358
        // Predicated region
        $region45: #{tpu_custom_call.1} parent=39 // pred_check
          %p360 = pneg %p148
        $region46: #{tpu_custom_call.1} parent=39 // pred_check_branch
          %362 = sbr.rel (%p360) target = $region48
        $region47: #{tpu_custom_call.1} parent=39 // pred_region
          %s363 = smul.u32 4, %s20
          %365 = vsyncadd %s356, 0
          %s366 = smul.addr %s363, 8
          %s367 = scalar_lea.hbm %s5, %s366
          %s368 = sshll.u32 %s359, 4
          %s369 = int_to_ptr.vmem [resolvable:$true] %s368
          %s370 = sshll.u32 %s367, 4
          %s371 = int_to_ptr.hbm [resolvable:$true] %s370
          %376 = dma.vmem_to_hbm [thread:$0]  %s369, 512, %s371, %s356, 128, 128, 8
        $region48: #{tpu_custom_call.1} parent=39 // pred_fallthru
          _
      $region40: #{tpu_custom_call.1} parent=5 // pred_fallthru
        _
      %p377 = scmp.le.s32.totalorder 2, %s15
      // Predicated region
      $region49: #{tpu_custom_call.1} parent=5 // pred_check
        %p378 = pneg %p377
      $region50: #{tpu_custom_call.1} parent=5 // pred_check_branch
        %380 = sbr.rel (%p378) target = $region52
      $region51: #{tpu_custom_call.1} parent=5 // pred_region
        %s381 = ssub.s32 %s15, 2
        // Predicated region
        $region53: #{tpu_custom_call.1} parent=51 // pred_check
          %p382 = pneg %p154
        $region54: #{tpu_custom_call.1} parent=51 // pred_check_branch
          %384 = sbr.rel (%p382) target = $region56
        $region55: #{tpu_custom_call.1} parent=51 // pred_region
          %s385 = sand.u32 %s139, 1
          %s386 = scalar_lea.sflag [#allocation4], %s385
          %s387 = sand.u32 %s139, 1
          %s388 = smul.addr %s387, 32
          %s389 = scalar_lea.vmem [#allocation5], %s388
          %391 = dma.done %s386, 512
        $region56: #{tpu_custom_call.1} parent=51 // pred_fallthru
          _
      $region52: #{tpu_custom_call.1} parent=5 // pred_fallthru
        _
    $region6: #{tpu_custom_call.1} parent=1 // loop_footer
      %s19 = sadd.s32 1, %s15
    $region7: #{tpu_custom_call.1} parent=1 // loop_footer_branch
      %14 = sbr.rel target = $region3
    $region8: #{tpu_custom_call.1} parent=1 // loop_exit
      _
    %392 = vsyncpa [#allocation3], 1
    %s393 = scalar_lea.sflag [#allocation3], 1
    %394 = vsyncpa %s393, 1
    %395 = vsyncpa [#allocation4], 1
    %s396 = scalar_lea.sflag [#allocation4], 1
    %397 = vsyncpa %s396, 1

</llo_original>
